<compile_context>
chip_gen: v5e
topology: v5e:2x2
jax: 0.10.0
libtpu: 0.0.40
codegen_flags: <defaults>
</compile_context>

<pallas_src>
import math
from functools import partial

import jax
import jax.numpy as jnp
from jax.experimental import pallas as pl
from jax.experimental.pallas import tpu as pltpu

EPS = 1e-5
SQRT2 = math.sqrt(2.0)


# ---------------------------------------------------------------------------
# in-kernel helpers (traced inside Pallas kernels)
# ---------------------------------------------------------------------------
def _gelu_exact(x):
    # PyTorch F.gelu default (erf-based)
    return 0.5 * x * (1.0 + jax.lax.erf(x / SQRT2))


def _layer_norm(x, gamma, beta):
    mu = jnp.mean(x, axis=-1, keepdims=True)
    var = jnp.mean((x - mu) ** 2, axis=-1, keepdims=True)
    return (x - mu) * jax.lax.rsqrt(var + EPS) * gamma + beta


def _vmem_limit(nbytes):
    # per-generation VMEM ceiling (capacity minus 8 MiB compiler headroom)
    cap = 128 << 20
    try:
        info = pltpu.get_tpu_info()
        cap = int(getattr(info, "vmem_capacity_bytes", cap))
    except Exception:
        pass
    ceiling = max(cap - (8 << 20), 16 << 20)
    return int(min(max(int(nbytes) + (8 << 20), 16 << 20), ceiling))


# ---------------------------------------------------------------------------
# Kernel 1: positional conv embedding (grouped taps, resident in VMEM) + GELU + residual add
#   grouped layout: x -> (B, G, Tp, Cg), taps -> (K, G, Cg_in, Cg_out)
#   conv output row t = sum_k xg[:, t+k, :] @ W[k]   (per group, batched over G)
# ---------------------------------------------------------------------------
def pos_conv_kernel(xg_ref, w_ref, bias_ref, out_ref, *, kernel_size, pad, seq_len):
    G = xg_ref.shape[1]
    Cg = xg_ref.shape[3]
    T = seq_len

    def tap(k, acc):
        xk = xg_ref[0, :, pl.ds(k, T), :].astype(jnp.bfloat16)        # (G, T, Cg)
        wk = w_ref[k]                                                   # (G, Cg, Cg) bf16
        return acc + jax.lax.dot_general(
            xk, wk, (((2,), (1,)), ((0,), (0,))),
            preferred_element_type=jnp.float32)                        # (G, T, Cg)

    acc = jax.lax.fori_loop(0, kernel_size, tap,
                            jnp.zeros((G, T, Cg), jnp.float32))

    conv = acc + bias_ref[...].astype(jnp.float32)                     # (G,1,Cg) broadcast
    # residual window (also covers the `num_remove` trim torchaudio applies for even K)
    xres = xg_ref[0, :, pad:pad + T, :].astype(jnp.float32)
    out_ref[0] = (xres + _gelu_exact(conv)).astype(out_ref.dtype)


def pos_conv_embed_add(x, w_g, bias_g):
    B, T, C = x.shape
    K, G, Cg, _ = w_g.shape
    pad = K // 2
    xpad = jnp.pad(x, ((0, 0), (pad, pad), (0, 0)))
    Tp = T + 2 * pad

    # wrapper-side layout plumbing: group-major channel layout (no in-kernel relayouts)
    xg = xpad.reshape(B, Tp, G, Cg).transpose(0, 2, 1, 3)               # (B, G, Tp, Cg)

    nbytes = (2 * (G * Tp * Cg * 4 + G * T * Cg * 4)        # double-buffered in/out blocks
              + 2 * K * G * Cg * Cg * 2                      # resident tap stack (2 bufs)
              + 3 * G * T * Cg * 4)                          # accumulator / intermediates

    out_g = pl.pallas_call(
        partial(pos_conv_kernel, kernel_size=K, pad=pad, seq_len=T),
        out_shape=jax.ShapeDtypeStruct((B, G, T, Cg), x.dtype),
        grid=(B,),
        in_specs=[
            pl.BlockSpec((1, G, Tp, Cg), lambda b: (b, 0, 0, 0)),
            pl.BlockSpec((K, G, Cg, Cg), lambda b: (0, 0, 0, 0)),   # resident across the grid
            pl.BlockSpec((G, 1, Cg), lambda b: (0, 0, 0)),
        ],
        out_specs=pl.BlockSpec((1, G, T, Cg), lambda b: (b, 0, 0, 0)),
        compiler_params=pltpu.CompilerParams(
            dimension_semantics=("parallel",),
            vmem_limit_bytes=_vmem_limit(nbytes)),
    )(xg, w_g, bias_g)

    # back to (B, T, C) (layout plumbing outside the kernel)
    return out_g.transpose(0, 2, 1, 3).reshape(B, T, C)


# ---------------------------------------------------------------------------
# Kernel 2: fused encoder stack (all layers + top-level LayerNorm in one pallas_call)
#   grid = (B, L); per-layer weights stacked along L and streamed by the BlockSpec pipeline;
#   activation carried across layers in a VMEM scratch.
# ---------------------------------------------------------------------------
def encoder_stack_kernel(x_ref, wqkv_ref, wo_ref, w1_ref, w2_ref, vecs_ref, lnf_ref,
                         out_ref, x_sc, ctx_sc,
                         *, num_heads, head_dim, layer_norm_first):
    l = pl.program_id(1)
    T, C = x_sc.shape
    F = w1_ref.shape[-1]

    @pl.when(l == 0)
    def _():
        x0 = x_ref[0].astype(jnp.float32)
        if layer_norm_first:                      # top-level LN applied before the layer stack
            x0 = _layer_norm(x0, lnf_ref[0], lnf_ref[1])
        x_sc[...] = x0

    # packed per-layer small vectors: one consolidated DMA per layer step
    bqkv = vecs_ref[0, 0, :3 * C]
    bo = vecs_ref[0, 1, :C]
    ln1_g = vecs_ref[0, 2, :C]
    ln1_b = vecs_ref[0, 3, :C]
    ln2_g = vecs_ref[0, 4, :C]
    ln2_b = vecs_ref[0, 5, :C]
    b1 = vecs_ref[0, 6, :F]
    b2 = vecs_ref[0, 7, :C]

    x = x_sc[...]                                 # (T, C) f32 activation carried across layers
    residual = x
    if layer_norm_first:
        x = _layer_norm(x, ln1_g, ln1_b)

    # ---- fused QKV projection: one (T,C)@(C,3C) MXU op; bf16 kept right after the bias add ----
    xb = x.astype(jnp.bfloat16)
    qkv = (jnp.dot(xb, wqkv_ref[0], preferred_element_type=jnp.float32)
           + bqkv).astype(jnp.bfloat16)           # (T, 3C) bf16

    # ---- self-attention (torchaudio SelfAttention semantics; scale folded into logits) ----
    # Per-head contexts go into a (T, C) bf16 scratch at static lane offsets; the output
    # projection is done ONCE at full contraction depth C (instead of H depth-head_dim matmuls).
    scale = head_dim ** -0.5
    # TODO(synk): lax.fori_loop over heads (bounded live ranges) for real H=12-16.
    for h in range(num_heads):
        s = h * head_dim
        qh = qkv[:, s:s + head_dim]
        kh = qkv[:, C + s:C + s + head_dim]
        vh = qkv[:, 2 * C + s:2 * C + s + head_dim]
        logits = jax.lax.dot_general(qh, kh, (((1,), (1,)), ((), ())),
                                     preferred_element_type=jnp.float32) * scale   # (T, T)
        logits = logits - jnp.max(logits, axis=-1, keepdims=True)
        p = jnp.exp(logits)
        p = p * pl.reciprocal(jnp.sum(p, axis=-1, keepdims=True), approx=True)
        ctx_sc[:, s:s + head_dim] = jnp.dot(
            p.astype(jnp.bfloat16), vh,
            preferred_element_type=jnp.float32).astype(jnp.bfloat16)

    attn = jnp.dot(ctx_sc[...], wo_ref[0], preferred_element_type=jnp.float32) + bo
    x = residual + attn                           # dropout = identity (eval)

    def ffn(z):
        zb = z.astype(jnp.bfloat16)
        h1 = jnp.dot(zb, w1_ref[0], preferred_element_type=jnp.float32) + b1
        h1 = _gelu_exact(h1).astype(jnp.bfloat16)
        return jnp.dot(h1, w2_ref[0], preferred_element_type=jnp.float32) + b2

    if layer_norm_first:
        x = x + ffn(_layer_norm(x, ln2_g, ln2_b))
    else:
        x = _layer_norm(x, ln1_g, ln1_b)
        x = _layer_norm(x + ffn(x), ln2_g, ln2_b)

    x_sc[...] = x

    @pl.when(l == pl.num_programs(1) - 1)
    def _():
        xo = x
        if not layer_norm_first:                  # top-level LN applied after the layer stack
            xo = _layer_norm(xo, lnf_ref[0], lnf_ref[1])
        out_ref[0] = xo.astype(out_ref.dtype)


def encoder_stack(x, stack, lnf, *, num_heads, layer_norm_first):
    B, T, C = x.shape
    L, _, F = stack["w1"].shape
    Dv = stack["vecs"].shape[-1]
    head_dim = C // num_heads

    in_specs = [
        pl.BlockSpec((1, T, C), lambda b, l: (b, 0, 0)),         # resident across l
        pl.BlockSpec((1, C, 3 * C), lambda b, l: (l, 0, 0)),     # streamed per layer
        pl.BlockSpec((1, C, C), lambda b, l: (l, 0, 0)),
        pl.BlockSpec((1, C, F), lambda b, l: (l, 0, 0)),
        pl.BlockSpec((1, F, C), lambda b, l: (l, 0, 0)),
        pl.BlockSpec((1, 8, Dv), lambda b, l: (l, 0, 0)),        # packed small vectors
        pl.BlockSpec((2, C), lambda b, l: (0, 0)),               # final LN gamma/beta
    ]

    # explicit VMEM budget: double-buffered blocks + matmul/softmax intermediates + scratch
    wbytes = (3 * C * C + C * C + C * F + F * C) * 2 + 8 * Dv * 4 + 2 * C * 4
    blocks = 2 * (2 * T * C * 4 + wbytes)
    inter = T * 3 * C * 2 + 2 * T * T * 4 + T * F * 6 + 6 * T * C * 4
    scratch = T * C * 4 + T * C * 2
    vmem = _vmem_limit(blocks + inter + scratch)

    return pl.pallas_call(
        partial(encoder_stack_kernel, num_heads=num_heads, head_dim=head_dim,
                layer_norm_first=layer_norm_first),
        out_shape=jax.ShapeDtypeStruct((B, T, C), x.dtype),
        grid=(B, L),
        in_specs=in_specs,
        out_specs=pl.BlockSpec((1, T, C), lambda b, l: (b, 0, 0)),
        scratch_shapes=[pltpu.VMEM((T, C), jnp.float32),     # carried activation
                        pltpu.VMEM((T, C), jnp.bfloat16)],   # per-head context accumulator
        compiler_params=pltpu.CompilerParams(
            dimension_semantics=("parallel", "arbitrary"),
            vmem_limit_bytes=vmem),
    )(x, stack["wqkv"], stack["wo"], stack["w1"], stack["w2"], stack["vecs"], lnf)


# ---------------------------------------------------------------------------
# Transformer forward (glue)
# ---------------------------------------------------------------------------
def transformer_forward(x, params, *, num_heads, layer_norm_first):
    x = pos_conv_embed_add(x, params["conv_w"], params["conv_bias"])
    # dropout: eval -> identity; layer_drop: eval -> every layer runs
    x = encoder_stack(x, params["stack"], params["lnf"],
                      num_heads=num_heads, layer_norm_first=layer_norm_first)
    return x


# ---------------------------------------------------------------------------
# Deterministic parameter construction
# ---------------------------------------------------------------------------
def init_params(key, embed_dim, num_heads, ffn_dim, num_layers, conv_kernel, conv_groups):
    C, F, K, G, L = embed_dim, ffn_dim, conv_kernel, conv_groups, num_layers
    Cg = C // G
    keys = iter(jax.random.split(key, 4 + 12 * L))

    def mat(shape, scale=0.02):
        return (scale * jax.random.normal(next(keys), shape)).astype(jnp.float32)

    # --- pos_conv_embed: weight-normed grouped Conv1d (out=C, in=C/G, kernel=K), wn dim=2 ---
    v = mat((C, Cg, K), scale=0.1)
    g = jnp.ones((1, 1, K), jnp.float32)
    w_eff = g * v / jnp.sqrt(jnp.sum(v * v, axis=(0, 1), keepdims=True))     # (C, Cg_in, K)
    # grouped tap layout (K, G, Cg_in, Cg_out): w_g[k,g,i,o] = w_eff[g*Cg+o, i, k]
    conv_w = jnp.transpose(w_eff.reshape(G, Cg, Cg, K), (3, 0, 2, 1)).astype(jnp.bfloat16)
    conv_bias = mat((C,)).reshape(G, 1, Cg)

    # --- top-level LayerNorm (row 0 = gamma, row 1 = beta) ---
    lnf = jnp.stack([jnp.ones((C,), jnp.float32), jnp.zeros((C,), jnp.float32)])

    # --- encoder layers: weights stacked along leading L; small vectors packed (L, 8, Dv) ---
    # Linear weights stored pre-transposed to (in, out) so kernels do x @ W + b.
    Dv = max(3 * C, F)

    def pad_row(vec):
        return jnp.pad(vec, (0, Dv - vec.shape[0]))

    wqkv, wo, w1, w2, vecs = [], [], [], [], []
    for _ in range(L):
        wqkv.append(jnp.concatenate([mat((C, C)), mat((C, C)), mat((C, C))], axis=1))
        wo.append(mat((C, C)))
        w1.append(mat((C, F)))
        w2.append(mat((F, C)))
        rows = [
            mat((3 * C,)),                      # bqkv
            mat((C,)),                          # bo
            jnp.ones((C,), jnp.float32),        # ln1_g
            jnp.zeros((C,), jnp.float32),       # ln1_b
            jnp.ones((C,), jnp.float32),        # ln2_g
            jnp.zeros((C,), jnp.float32),       # ln2_b
            mat((F,)),                          # b1
            mat((C,)),                          # b2
        ]
        vecs.append(jnp.stack([pad_row(r) for r in rows]))

    stack = {
        "wqkv": jnp.stack(wqkv).astype(jnp.bfloat16),   # (L, C, 3C)
        "wo": jnp.stack(wo).astype(jnp.bfloat16),       # (L, C, C)
        "w1": jnp.stack(w1).astype(jnp.bfloat16),       # (L, C, F)
        "w2": jnp.stack(w2).astype(jnp.bfloat16),       # (L, F, C)
        "vecs": jnp.stack(vecs),                        # (L, 8, Dv) f32
    }
    return {"conv_w": conv_w, "conv_bias": conv_bias, "lnf": lnf, "stack": stack}


# ---------------------------------------------------------------------------
if __name__ == "__main__":
    B, T, C = 2, 16, 32          # batch, time, embed_dim
    NUM_HEADS = 4
    FFN_DIM = 64
    NUM_LAYERS = 2
    CONV_KERNEL = 3              # odd -> num_remove = 0 (even also handled by the kernel)
    CONV_GROUPS = 4
    LAYER_NORM_FIRST = False     # post-norm config (LayerNorm applied after the layer stack)

    key = jax.random.PRNGKey(0)
    k_x, k_p = jax.random.split(key)
    x = jax.random.normal(k_x, (B, T, C), dtype=jnp.float32)
    params = init_params(k_p, C, NUM_HEADS, FFN_DIM, NUM_LAYERS, CONV_KERNEL, CONV_GROUPS)

    out = transformer_forward(x, params, num_heads=NUM_HEADS,
                              layer_norm_first=LAYER_NORM_FIRST)
    out = jax.block_until_ready(out)
    assert out.shape == (B, T, C) and bool(jnp.all(jnp.isfinite(out)))
    print("KERNEL_OK")
</pallas_src>

<mosaic_0001>
module attributes {stable_mosaic.version = 11 : i64} {
  func.func @pos_conv_kernel(%arg0: i32, %arg1: memref<1x4x18x8xf32, #tpu.memory_space<vmem>>, %arg2: memref<3x4x8x8xbf16, #tpu.memory_space<vmem>>, %arg3: memref<4x1x8xf32, #tpu.memory_space<vmem>>, %arg4: memref<1x4x16x8xf32, #tpu.memory_space<vmem>>) attributes {dimension_semantics = [#tpu.dimension_semantics<parallel>], iteration_bounds = array<i64: 2>, scalar_prefetch = 0 : i64, scratch_operands = 0 : i64, tpu.core_type = #tpu.core_type<tc>, window_params = [{transform_indices = @transform_0, window_bounds = array<i64: 1, 4, 18, 8>}, {pipeline_mode = #tpu.pipeline_mode<synchronous>, transform_indices = @transform_1, window_bounds = array<i64: 3, 4, 8, 8>}, {pipeline_mode = #tpu.pipeline_mode<synchronous>, transform_indices = @transform_2, window_bounds = array<i64: 4, 1, 8>}, {transform_indices = @transform_3, window_bounds = array<i64: 1, 4, 16, 8>}]} {
    %cst = arith.constant 0.000000e+00 : f32
    %0 = vector.broadcast %cst : f32 to vector<4x16x8xf32>
    %c0_i32 = arith.constant 0 : i32
    %c3_i32 = arith.constant 3 : i32
    %1 = arith.addi %c0_i32, %c3_i32 : i32
    %c1_i32 = arith.constant 1 : i32
    %2 = scf.for %arg5 = %c0_i32 to %1 step %c1_i32 iter_args(%arg6 = %0) -> (vector<4x16x8xf32>)  : i32 {
      %c0_13 = arith.constant 0 : index
      %c0_14 = arith.constant 0 : index
      %20 = arith.index_cast %arg5 : i32 to index
      %c0_15 = arith.constant 0 : index
      %21 = vector.load %arg1[%c0_13, %c0_14, %20, %c0_15] : memref<1x4x18x8xf32, #tpu.memory_space<vmem>>, vector<1x4x16x8xf32>
      %22 = vector.shape_cast %21 : vector<1x4x16x8xf32> to vector<4x16x8xf32>
      %23 = arith.truncf %22 : vector<4x16x8xf32> to vector<4x16x8xbf16>
      %24 = arith.index_cast %arg5 : i32 to index
      %c0_16 = arith.constant 0 : index
      %c0_17 = arith.constant 0 : index
      %c0_18 = arith.constant 0 : index
      %25 = vector.load %arg2[%24, %c0_16, %c0_17, %c0_18] : memref<3x4x8x8xbf16, #tpu.memory_space<vmem>>, vector<1x4x8x8xbf16>
      %26 = vector.shape_cast %25 : vector<1x4x8x8xbf16> to vector<4x8x8xbf16>
      %cst_19 = arith.constant dense<0.000000e+00> : vector<4x16x8xf32>
      %27 = tpu.matmul %23, %26, %cst_19 {dimension_numbers = #tpu.dot_dimension_numbers<[2], [1], [1], [2], [0, 0, 0, 1, 1, 2], [0], [0]>} : vector<4x16x8xbf16>, vector<4x8x8xbf16>, vector<4x16x8xf32> -> vector<4x16x8xf32>
      %28 = arith.addf %arg6, %27 : vector<4x16x8xf32>
      scf.yield %28 : vector<4x16x8xf32>
    }
    %c3_i32_0 = arith.constant 3 : i32
    %c0 = arith.constant 0 : index
    %c0_1 = arith.constant 0 : index
    %c0_2 = arith.constant 0 : index
    %3 = vector.load %arg3[%c0, %c0_1, %c0_2] : memref<4x1x8xf32, #tpu.memory_space<vmem>>, vector<4x1x8xf32>
    %4 = vector.broadcast %3 : vector<4x1x8xf32> to vector<4x16x8xf32>
    %5 = arith.addf %2, %4 : vector<4x16x8xf32>
    %c0_3 = arith.constant 0 : index
    %c0_4 = arith.constant 0 : index
    %c1 = arith.constant 1 : index
    %c0_5 = arith.constant 0 : index
    %6 = vector.load %arg1[%c0_3, %c0_4, %c1, %c0_5] : memref<1x4x18x8xf32, #tpu.memory_space<vmem>>, vector<1x4x16x8xf32>
    %7 = vector.shape_cast %6 : vector<1x4x16x8xf32> to vector<4x16x8xf32>
    %cst_6 = arith.constant 5.000000e-01 : f32
    %8 = vector.broadcast %cst_6 : f32 to vector<4x16x8xf32>
    %9 = arith.mulf %8, %5 : vector<4x16x8xf32>
    %cst_7 = arith.constant 1.41421354 : f32
    %10 = vector.broadcast %cst_7 : f32 to vector<4x16x8xf32>
    %11 = arith.divf %5, %10 : vector<4x16x8xf32>
    %12 = math.erf %11 : vector<4x16x8xf32>
    %cst_8 = arith.constant 1.000000e+00 : f32
    %13 = vector.broadcast %cst_8 : f32 to vector<4x16x8xf32>
    %14 = arith.addf %13, %12 : vector<4x16x8xf32>
    %15 = arith.mulf %9, %14 : vector<4x16x8xf32>
    %16 = arith.addf %7, %15 : vector<4x16x8xf32>
    %c0_9 = arith.constant 0 : index
    %c0_10 = arith.constant 0 : index
    %c0_11 = arith.constant 0 : index
    %c0_12 = arith.constant 0 : index
    %17 = vector.load %arg4[%c0_9, %c0_10, %c0_11, %c0_12] : memref<1x4x16x8xf32, #tpu.memory_space<vmem>>, vector<1x4x16x8xf32>
    %18 = vector.shape_cast %17 : vector<1x4x16x8xf32> to vector<4x16x8xf32>
    %19 = vector.shape_cast %16 : vector<4x16x8xf32> to vector<1x4x16x8xf32>
    tpu.vector_store %arg4[%c0_9, %c0_10, %c0_11, %c0_12], %19 {strides = array<i32>} : memref<1x4x16x8xf32, #tpu.memory_space<vmem>>, vector<1x4x16x8xf32>,
    return
  }
  func.func @transform_0(%arg0: i32) -> (i32, i32, i32, i32) {
    %c0_i32 = arith.constant 0 : i32
    %c0_i32_0 = arith.constant 0 : i32
    %c0_i32_1 = arith.constant 0 : i32
    %c0_i32_2 = arith.constant 0 : i32
    return %arg0, %c0_i32, %c0_i32_0, %c0_i32_1 : i32, i32, i32, i32
  }
  func.func @transform_1(%arg0: i32) -> (i32, i32, i32, i32) {
    %c0_i32 = arith.constant 0 : i32
    %c0_i32_0 = arith.constant 0 : i32
    %c0_i32_1 = arith.constant 0 : i32
    %c0_i32_2 = arith.constant 0 : i32
    %c0_i32_3 = arith.constant 0 : i32
    return %c0_i32, %c0_i32_0, %c0_i32_1, %c0_i32_2 : i32, i32, i32, i32
  }
  func.func @transform_2(%arg0: i32) -> (i32, i32, i32) {
    %c0_i32 = arith.constant 0 : i32
    %c0_i32_0 = arith.constant 0 : i32
    %c0_i32_1 = arith.constant 0 : i32
    %c0_i32_2 = arith.constant 0 : i32
    return %c0_i32, %c0_i32_0, %c0_i32_1 : i32, i32, i32
  }
  func.func @transform_3(%arg0: i32) -> (i32, i32, i32, i32) {
    %c0_i32 = arith.constant 0 : i32
    %c0_i32_0 = arith.constant 0 : i32
    %c0_i32_1 = arith.constant 0 : i32
    %c0_i32_2 = arith.constant 0 : i32
    return %arg0, %c0_i32, %c0_i32_0, %c0_i32_1 : i32, i32, i32, i32
  }
}

</mosaic_0001>

<llo_original>
// kernel: tpu_custom_call.1
$region0: #{tpu_custom_call.1}
  #allocation0 [shape = 'u32[]', space=smem, size = 0x4, offset = 0x4, fixed_abs, tag = 'smem constant byte address 0x4 - core index']
  #allocation1 [shape = 'u32[72,128]{1,0:T(1,128)}', space=vmem, size = 0x9000, scoped, tag = 'internal scratch']
  %s0 = inlined_call_operand.vmem [shape: f32[2,4,18,8], index: 0, kind: input, shape index: {}]
  %s1 = inlined_call_operand.vmem [shape: bf16[3,4,8,8], index: 1, kind: input, shape index: {}]
  %s2 = inlined_call_operand.vmem [shape: f32[4,1,8], index: 2, kind: input, shape index: {}]
  %s3 = inlined_call_operand.vmem [shape: f32[2,4,16,8], index: 3, kind: output, shape index: {}]
  %s4 = sld [smem:[#allocation0]]
  $region52: #{tpu_custom_call.1} parent=0
    _
  %s6 = ssub.s32 1, %s4
  %s7 = scalar_select 0, %s6, %s4
  loop: start=0, step=1, limit=4
  $region2: #{tpu_custom_call.1} parent=0 // loop_pre_header
    _
  $region3: #{tpu_custom_call.1} parent=0 // loop_header
    %s9 = sphi 0, %s13
    %p10 = scmp.ge.s32.totalorder %s9, 4
    %s19 = sphi 0, %s21
    %s22 = sphi 0, %s19
    %s23 = sphi 0, %s22
    %s39 = sphi 0, %s23
    %s43 = sphi 0, %s43
    %s45 = sphi 0, %s43
    %s46 = sphi 0, %s45
    %s60 = sphi 0, %s46
    %s64 = sphi 0, %s64
    %s66 = sphi 0, %s64
    %s67 = sphi 0, %s66
    %s81 = sphi 0, %s67
    %s87 = sphi 0, %s89
    %s90 = sphi 0, %s87
    %s91 = sphi 0, %s90
    %s107 = sphi 0, %s91
  $region4: #{tpu_custom_call.1} parent=0 // loop_header_branch
    %12 = sbr.rel (%p10) target = $region8
  $region5: #{tpu_custom_call.1} parent=0 // loop_body
    %s14 = ssub.s32 %s9, 1
    %s15 = ssub.s32 %s9, 2
    %s16 = sadd.s32 %s9, 1
    %s17 = ssub.s32 %s9, %s16
    %p18 = scmp.eq.s32.totalorder %s17, 0
    %s20 = sadd.s32 %s19, 1
    %s21 = scalar_select %p18, %s19, %s20
    %p24 = pneg %p18
    %p25 = scmp.eq.s32.totalorder %s9, 1
    %p26 = por %p24, %p25
    %p27 = scmp.ne.s32.totalorder %s19, %s22
    %p28 = scmp.eq.s32.totalorder %s9, 0
    %p29 = por %p27, %p28
    %p30 = scmp.ne.s32.totalorder %s19, %s22
    %p31 = scmp.eq.s32.totalorder %s14, 1
    %p32 = por %p30, %p31
    %p33 = scmp.ne.s32.totalorder %s22, %s23
    %p34 = scmp.eq.s32.totalorder %s14, 0
    %p35 = por %p33, %p34
    %p36 = scmp.ne.s32.totalorder %s22, %s23
    %p37 = scmp.eq.s32.totalorder %s15, 1
    %p38 = por %p36, %p37
    %p40 = scmp.ne.s32.totalorder %s23, %s39
    %p41 = scmp.eq.s32.totalorder %s15, 0
    %p42 = por %p40, %p41
    %s44 = sadd.s32 %s43, 1
    %p47 = scmp.eq.s32.totalorder %s9, 1
    %p48 = scmp.ne.s32.totalorder %s43, %s45
    %p49 = scmp.eq.s32.totalorder %s9, 0
    %p50 = por %p48, %p49
    %p51 = scmp.ne.s32.totalorder %s43, %s45
    %p52 = scmp.eq.s32.totalorder %s14, 1
    %p53 = por %p51, %p52
    %p54 = scmp.ne.s32.totalorder %s45, %s46
    %p55 = scmp.eq.s32.totalorder %s14, 0
    %p56 = por %p54, %p55
    %p57 = scmp.ne.s32.totalorder %s45, %s46
    %p58 = scmp.eq.s32.totalorder %s15, 1
    %p59 = por %p57, %p58
    %p61 = scmp.ne.s32.totalorder %s46, %s60
    %p62 = scmp.eq.s32.totalorder %s15, 0
    %p63 = por %p61, %p62
    %s65 = sadd.s32 %s64, 1
    %p68 = scmp.eq.s32.totalorder %s9, 1
    %p69 = scmp.ne.s32.totalorder %s64, %s66
    %p70 = scmp.eq.s32.totalorder %s9, 0
    %p71 = por %p69, %p70
    %p72 = scmp.ne.s32.totalorder %s64, %s66
    %p73 = scmp.eq.s32.totalorder %s14, 1
    %p74 = por %p72, %p73
    %p75 = scmp.ne.s32.totalorder %s66, %s67
    %p76 = scmp.eq.s32.totalorder %s14, 0
    %p77 = por %p75, %p76
    %p78 = scmp.ne.s32.totalorder %s66, %s67
    %p79 = scmp.eq.s32.totalorder %s15, 1
    %p80 = por %p78, %p79
    %p82 = scmp.ne.s32.totalorder %s67, %s81
    %p83 = scmp.eq.s32.totalorder %s15, 0
    %p84 = por %p82, %p83
    %s85 = ssub.s32 %s9, %s16
    %p86 = scmp.eq.s32.totalorder %s85, 0
    %s88 = sadd.s32 %s87, 1
    %s89 = scalar_select %p86, %s87, %s88
    %p92 = pneg %p86
    %p93 = scmp.eq.s32.totalorder %s9, 1
    %p94 = por %p92, %p93
    %p95 = scmp.ne.s32.totalorder %s87, %s90
    %p96 = scmp.eq.s32.totalorder %s9, 0
    %p97 = por %p95, %p96
    %p98 = scmp.ne.s32.totalorder %s87, %s90
    %p99 = scmp.eq.s32.totalorder %s14, 1
    %p100 = por %p98, %p99
    %p101 = scmp.ne.s32.totalorder %s90, %s91
    %p102 = scmp.eq.s32.totalorder %s14, 0
    %p103 = por %p101, %p102
    %p104 = scmp.ne.s32.totalorder %s90, %s91
    %p105 = scmp.eq.s32.totalorder %s15, 1
    %p106 = por %p104, %p105
    %p108 = scmp.ne.s32.totalorder %s91, %s107
    %p109 = scmp.eq.s32.totalorder %s15, 0
    %p110 = por %p108, %p109
    %p111 = scmp.le.s32.totalorder 1, %s9
    %p112 = scmp.lt.s32.totalorder %s9, 3
    %p113 = pnand %p111, %p112
    %p114 = pneg %p113
    // Predicated region
    $region9: #{tpu_custom_call.1} parent=5 // pred_check
      _
    $region10: #{tpu_custom_call.1} parent=5 // pred_check_branch
      %116 = sbr.rel (%p113) target = $region12
    $region11: #{tpu_custom_call.1} parent=5 // pred_region
      %s117 = ssub.s32 %s9, 1
      // Predicated region
      $region13: #{tpu_custom_call.1} parent=11 // pred_check
        %p118 = pneg %p56
      $region14: #{tpu_custom_call.1} parent=11 // pred_check_branch
        %120 = sbr.rel (%p118) target = $region16
      $region15: #{tpu_custom_call.1} parent=11 // pred_region
        _
      $region16: #{tpu_custom_call.1} parent=11 // pred_fallthru
        _
      // Predicated region
      $region17: #{tpu_custom_call.1} parent=11 // pred_check
        %p121 = pneg %p77
      $region18: #{tpu_custom_call.1} parent=11 // pred_check_branch
        %123 = sbr.rel (%p121) target = $region20
      $region19: #{tpu_custom_call.1} parent=11 // pred_region
        _
      $region20: #{tpu_custom_call.1} parent=11 // pred_fallthru
        _
    $region12: #{tpu_custom_call.1} parent=5 // pred_fallthru
      _
    %p124 = scmp.lt.s32.totalorder %s9, 2
    // Predicated region
    $region21: #{tpu_custom_call.1} parent=5 // pred_check
      %p125 = pneg %p124
    $region22: #{tpu_custom_call.1} parent=5 // pred_check_branch
      %127 = sbr.rel (%p125) target = $region24
    $region23: #{tpu_custom_call.1} parent=5 // pred_region
      // Predicated region
      $region25: #{tpu_custom_call.1} parent=23 // pred_check
        %p128 = pneg %p29
      $region26: #{tpu_custom_call.1} parent=23 // pred_check_branch
        %130 = sbr.rel (%p128) target = $region28
      $region27: #{tpu_custom_call.1} parent=23 // pred_region
        %p131 = scmp.lt.s32.totalorder %s9, 1
        %s132 = scalar_select %p131, %s9, 1
        %s133 = smul.addr %s132, 12
        %s134 = smul.addr %s133, 8
        %s135 = scalar_lea.vmem %s0, %s134
      $region28: #{tpu_custom_call.1} parent=23 // pred_fallthru
        _
    $region24: #{tpu_custom_call.1} parent=5 // pred_fallthru
      _
    %p136 = scmp.le.s32.totalorder 1, %s9
    %p137 = scmp.lt.s32.totalorder %s9, 3
    %p138 = pnand %p136, %p137
    %p139 = pneg %p138
    // Predicated region
    $region29: #{tpu_custom_call.1} parent=5 // pred_check
      _
    $region30: #{tpu_custom_call.1} parent=5 // pred_check_branch
      %141 = sbr.rel (%p138) target = $region32
    $region31: #{tpu_custom_call.1} parent=5 // pred_region
      %s142 = ssub.s32 %s9, 1
      %p143 = scmp.lt.s32.totalorder %s14, 1
      %s144 = scalar_select %p143, %s14, 1
      %s145 = smul.addr %s144, 12
      %s146 = smul.addr %s145, 8
      %s147 = scalar_lea.vmem %s0, %s146
      %p148 = pneg %p35
      %p149 = pneg %p32
      %p150 = pneg %p56
      %p151 = pneg %p53
      %p152 = pneg %p77
      %p153 = pneg %p74
      %p154 = pneg %p103
      %p155 = pneg %p100
      %p156 = scmp.lt.s32.totalorder %s14, 1
      %s157 = scalar_select %p156, %s14, 1
      %s158 = smul.addr %s157, 8
      %s159 = smul.addr %s158, 8
      %s160 = scalar_lea.vmem %s3, %s159
      %p161 = scmp.lt.s32.totalorder %s14, 1
      %s162 = scalar_select %p161, %s14, 1
      %s163 = smul.addr %s162, 12
      %s164 = smul.addr %s163, 8
      %s165 = scalar_lea.vmem %s0, %s164
      %p166 = scmp.lt.s32.totalorder %s14, 1
      %s167 = scalar_select %p166, %s14, 1
      %s168 = smul.addr %s167, 8
      %s169 = smul.addr %s168, 8
      %s170 = scalar_lea.vmem %s3, %s169
      loop: start=0, step=1, limit=3
      $region33: #{tpu_custom_call.1} parent=31 // loop_pre_header
        _
      $region34: #{tpu_custom_call.1} parent=31 // loop_header
        %s173 = sphi 0, %s177
        %p174 = scmp.ge.s32.totalorder %s173, 3
        %v178 = vphi 0.0, %v312
        %v179 = vphi 0.0, %v313
        %v180 = vphi 0.0, %v314
        %v181 = vphi 0.0, %v315
        %v182 = vphi 0.0, %v316
        %v183 = vphi 0.0, %v317
        %v184 = vphi 0.0, %v318
        %v185 = vphi 0.0, %v319
      $region35: #{tpu_custom_call.1} parent=31 // loop_header_branch
        %176 = sbr.rel (%p174) target = $region39
      $region36: #{tpu_custom_call.1} parent=31 // loop_body
        %s186 = scalar_lea.vmem %s165, %s173
        %v187 = vld [vmem:[%s186] sm:$0xff]
        %v188 = vld [vmem:[%s186 + $0x8] sm:$0xff]
        %v189 = vld [vmem:[%s186 + $0x18] sm:$0xff]
        %v190 = vld [vmem:[%s186 + $0x20] sm:$0xff]
        %v191 = vld [vmem:[%s186 + $0x30] sm:$0xff]
        %v192 = vld [vmem:[%s186 + $0x38] sm:$0xff]
        %v193 = vld [vmem:[%s186 + $0x48] sm:$0xff]
        %v194 = vld [vmem:[%s186 + $0x50] sm:$0xff]
        %v195 = vpack.c.bf16 %v187, %v187
        %v196 = vpack.c.bf16 %v188, %v188
        %v197 = vpack.c.bf16 %v189, %v189
        %v198 = vpack.c.bf16 %v190, %v190
        %v199 = vpack.c.bf16 %v191, %v191
        %v200 = vpack.c.bf16 %v192, %v192
        %v201 = vpack.c.bf16 %v193, %v193
        %v202 = vpack.c.bf16 %v194, %v194
        %s203 = smul.u32 %s173, 4
        %s204 = smul.addr %s203, 4
        %s205 = scalar_lea.vmem %s1, %s204
        %v206 = vld [vmem:[%s205] sm:$0xf]
        %v207 = vld [vmem:[%s205 + $0x4] sm:$0xf]
        %v208 = vld [vmem:[%s205 + $0x8] sm:$0xf]
        %v209 = vld [vmem:[%s205 + $0xc] sm:$0xf]
        %v212 = vunpack.c.l.b16 %v195
        %v213 = vunpack.c.l.b16 %v196
        %v214 = vpack.c.b16 %v213, %v212
        %vm215 = vcmask 64512
        %v217 = vsel %vm215, %v214, 0
        %vm219 = vcmask 1043456
        %v221 = vsel %vm219, %v206, 0
        %223 = vmatpush.bf16.msra.mxu0 0
        %224 = vmatpush.bf16.msra.mxu0 0
        %225 = vmatpush.bf16.msra.mxu0 0
        %226 = vmatpush.bf16.msra.mxu0 0
        %227 = vmatpush.bf16.msra.mxu0 0
        %228 = vmatpush.bf16.msra.mxu0 0
        %229 = vmatpush.bf16.msra.mxu0 0
        %230 = vmatpush.bf16.msra.mxu0 %v221
        %231 = vmatmul.bf16.gmra.mxu0 %v217
        %v232 = vpop.f32.mrf.mxu0
        %v233 = vadd.f32 0.0, %v232
        %v234 = vpop.f32.mrf.mxu0
        %v235 = vadd.f32 0.0, %v234
        %236 = vdwg.mxu0
        %v239 = vunpack.c.l.b16 %v197
        %v240 = vunpack.c.l.b16 %v198
        %v241 = vpack.c.b16 %v240, %v239
        %v243 = vsel %vm215, %v241, 0
        %v246 = vsel %vm219, %v207, 0
        %248 = vmatpush.bf16.msra.mxu0 0
        %249 = vmatpush.bf16.msra.mxu0 0
        %250 = vmatpush.bf16.msra.mxu0 0
        %251 = vmatpush.bf16.msra.mxu0 0
        %252 = vmatpush.bf16.msra.mxu0 0
        %253 = vmatpush.bf16.msra.mxu0 0
        %254 = vmatpush.bf16.msra.mxu0 0
        %255 = vmatpush.bf16.msra.mxu0 %v246
        %256 = vmatmul.bf16.gmra.mxu0 %v243
        %v257 = vpop.f32.mrf.mxu0
        %v258 = vadd.f32 0.0, %v257
        %v259 = vpop.f32.mrf.mxu0
        %v260 = vadd.f32 0.0, %v259
        %261 = vdwg.mxu0
        %v264 = vunpack.c.l.b16 %v199
        %v265 = vunpack.c.l.b16 %v200
        %v266 = vpack.c.b16 %v265, %v264
        %v268 = vsel %vm215, %v266, 0
        %v271 = vsel %vm219, %v208, 0
        %273 = vmatpush.bf16.msra.mxu0 0
        %274 = vmatpush.bf16.msra.mxu0 0
        %275 = vmatpush.bf16.msra.mxu0 0
        %276 = vmatpush.bf16.msra.mxu0 0
        %277 = vmatpush.bf16.msra.mxu0 0
        %278 = vmatpush.bf16.msra.mxu0 0
        %279 = vmatpush.bf16.msra.mxu0 0
        %280 = vmatpush.bf16.msra.mxu0 %v271
        %281 = vmatmul.bf16.gmra.mxu0 %v268
        %v282 = vpop.f32.mrf.mxu0
        %v283 = vadd.f32 0.0, %v282
        %v284 = vpop.f32.mrf.mxu0
        %v285 = vadd.f32 0.0, %v284
        %286 = vdwg.mxu0
        %v289 = vunpack.c.l.b16 %v201
        %v290 = vunpack.c.l.b16 %v202
        %v291 = vpack.c.b16 %v290, %v289
        %v293 = vsel %vm215, %v291, 0
        %v296 = vsel %vm219, %v209, 0
        %298 = vmatpush.bf16.msra.mxu0 0
        %299 = vmatpush.bf16.msra.mxu0 0
        %300 = vmatpush.bf16.msra.mxu0 0
        %301 = vmatpush.bf16.msra.mxu0 0
        %302 = vmatpush.bf16.msra.mxu0 0
        %303 = vmatpush.bf16.msra.mxu0 0
        %304 = vmatpush.bf16.msra.mxu0 0
        %305 = vmatpush.bf16.msra.mxu0 %v296
        %306 = vmatmul.bf16.gmra.mxu0 %v293
        %v307 = vpop.f32.mrf.mxu0
        %v308 = vadd.f32 0.0, %v307
        %v309 = vpop.f32.mrf.mxu0
        %v310 = vadd.f32 0.0, %v309
        %311 = vdwg.mxu0
        %v312 = vadd.f32 %v178, %v233
        %v313 = vadd.f32 %v179, %v235
        %v314 = vadd.f32 %v180, %v258
        %v315 = vadd.f32 %v181, %v260
        %v316 = vadd.f32 %v182, %v283
        %v317 = vadd.f32 %v183, %v285
        %v318 = vadd.f32 %v184, %v308
        %v319 = vadd.f32 %v185, %v310
      $region37: #{tpu_custom_call.1} parent=31 // loop_footer
        %s177 = sadd.s32 1, %s173
      $region38: #{tpu_custom_call.1} parent=31 // loop_footer_branch
        %172 = sbr.rel target = $region34
      $region39: #{tpu_custom_call.1} parent=31 // loop_exit
        _
      %v320 = vld [vmem:[%s2] sm:$0x1]
      %v321 = vld [vmem:[%s2 + $0x1] sm:$0x1]
      %v322 = vld [vmem:[%s2 + $0x2] sm:$0x1]
      %v323 = vld [vmem:[%s2 + $0x3] sm:$0x1]
      %v328 = vperm.slane %v320, 0
      %v329 = vperm.slane %v321, 0
      %v330 = vperm.slane %v322, 0
      %v331 = vperm.slane %v323, 0
      %v336 = vadd.f32 %v178, %v328
      %v337 = vadd.f32 %v179, %v328
      %v338 = vadd.f32 %v180, %v329
      %v339 = vadd.f32 %v181, %v329
      %v340 = vadd.f32 %v182, %v330
      %v341 = vadd.f32 %v183, %v330
      %v342 = vadd.f32 %v184, %v331
      %v343 = vadd.f32 %v185, %v331
      %v344 = vld [vmem:[%s165 + $0x1] sm:$0xff]
      %v345 = vld [vmem:[%s165 + $0x9] sm:$0xff]
      %v346 = vld [vmem:[%s165 + $0x19] sm:$0xff]
      %v347 = vld [vmem:[%s165 + $0x21] sm:$0xff]
      %v348 = vld [vmem:[%s165 + $0x31] sm:$0xff]
      %v349 = vld [vmem:[%s165 + $0x39] sm:$0xff]
      %v350 = vld [vmem:[%s165 + $0x49] sm:$0xff]
      %v351 = vld [vmem:[%s165 + $0x51] sm:$0xff]
      %v352 = vmul.f32 %v336, 0.5
      %v353 = vmul.f32 %v337, 0.5
      %v354 = vmul.f32 %v338, 0.5
      %v355 = vmul.f32 %v339, 0.5
      %v356 = vmul.f32 %v340, 0.5
      %v357 = vmul.f32 %v341, 0.5
      %v358 = vmul.f32 %v342, 0.5
      %v359 = vmul.f32 %v343, 0.5
      %v360 = vrcp.pop 1.4142135
      %v361 = vmul.f32 1.4142135, %v360
      %v362 = vsub.f32 1.0, %v361
      %v363 = vmul.f32 %v360, %v362
      %v364 = vadd.f32 %v360, %v363
      %vm365 = vweird.f32 %v360
      %v366 = vsel %vm365, %v360, %v364
      %v367 = vmul.f32 %v336, %v366
      %v368 = vmul.f32 %v337, %v366
      %v369 = vmul.f32 %v338, %v366
      %v370 = vmul.f32 %v339, %v366
      %v371 = vmul.f32 %v340, %v366
      %v372 = vmul.f32 %v341, %v366
      %v373 = vmul.f32 %v342, %v366
      %v374 = vmul.f32 %v343, %v366
      %v375 = vmul.f32 %v367, %v367
      %v376 = vmin.f32 16.0, %v375
      %v377 = vmul.f32 %v376, 2.1237322e-06
      %v378 = vadd.f32 %v377, 0.00028619796
      %v379 = vmul.f32 %v376, %v378
      %v380 = vadd.f32 %v379, 0.0036580483
      %v381 = vmul.f32 %v376, %v380
      %v382 = vadd.f32 %v381, 0.05243302
      %v383 = vmul.f32 %v376, %v382
      %v384 = vadd.f32 %v383, 0.18741608
      %v385 = vmul.f32 %v376, %v384
      %v386 = vadd.f32 %v385, 1.1283791
      %v387 = vmul.f32 %v367, %v386
      %v388 = vmul.f32 %v376, 3.8918573e-05
      %v389 = vadd.f32 %v388, 0.001143296
      %v390 = vmul.f32 %v376, %v389
      %v391 = vadd.f32 %v390, 0.014752088
      %v392 = vmul.f32 %v376, %v391
      %v393 = vadd.f32 %v392, 0.112945676
      %v394 = vmul.f32 %v376, %v393
      %v395 = vadd.f32 %v394, 0.4994258
      %v396 = vmul.f32 %v376, %v395
      %v397 = vadd.f32 %v396, 1.0
      %v398 = vrcp.pop %v397
      %v399 = vmul.f32 %v397, %v398
      %v400 = vsub.f32 1.0, %v399
      %v401 = vmul.f32 %v398, %v400
      %v402 = vadd.f32 %v398, %v401
      %vm403 = vweird.f32 %v397
      %vm404 = vweird.f32 %v398
      %vm405 = vmor %vm403, %vm404
      %v406 = vsel %vm405, %v398, %v402
      %v407 = vand.u32 2147483647, %v397
      %vm408 = vcmp.eq.f32.partialorder %v407, 8.507059e+37
      %v409 = vand.u32 %v397, 2147483648
      %v410 = vor.u32 1.1754944e-38, %v409
      %v411 = vsel %vm408, %v410, %v406
      %v412 = vmul.f32 %v387, %v411
      %v413 = vmin.f32 %v412, 1.0
      %v414 = vmax.f32 %v413, -1.0
      %v415 = vmul.f32 %v368, %v368
      %v416 = vmin.f32 16.0, %v415
      %v417 = vmul.f32 %v416, 2.1237322e-06
      %v418 = vadd.f32 %v417, 0.00028619796
      %v419 = vmul.f32 %v416, %v418
      %v420 = vadd.f32 %v419, 0.0036580483
      %v421 = vmul.f32 %v416, %v420
      %v422 = vadd.f32 %v421, 0.05243302
      %v423 = vmul.f32 %v416, %v422
      %v424 = vadd.f32 %v423, 0.18741608
      %v425 = vmul.f32 %v416, %v424
      %v426 = vadd.f32 %v425, 1.1283791
      %v427 = vmul.f32 %v368, %v426
      %v428 = vmul.f32 %v416, 3.8918573e-05
      %v429 = vadd.f32 %v428, 0.001143296
      %v430 = vmul.f32 %v416, %v429
      %v431 = vadd.f32 %v430, 0.014752088
      %v432 = vmul.f32 %v416, %v431
      %v433 = vadd.f32 %v432, 0.112945676
      %v434 = vmul.f32 %v416, %v433
      %v435 = vadd.f32 %v434, 0.4994258
      %v436 = vmul.f32 %v416, %v435
      %v437 = vadd.f32 %v436, 1.0
      %v438 = vrcp.pop %v437
      %v439 = vmul.f32 %v437, %v438
      %v440 = vsub.f32 1.0, %v439
      %v441 = vmul.f32 %v438, %v440
      %v442 = vadd.f32 %v438, %v441
      %vm443 = vweird.f32 %v437
      %vm444 = vweird.f32 %v438
      %vm445 = vmor %vm443, %vm444
      %v446 = vsel %vm445, %v438, %v442
      %v447 = vand.u32 2147483647, %v437
      %vm448 = vcmp.eq.f32.partialorder %v447, 8.507059e+37
      %v449 = vand.u32 %v437, 2147483648
      %v450 = vor.u32 1.1754944e-38, %v449
      %v451 = vsel %vm448, %v450, %v446
      %v452 = vmul.f32 %v427, %v451
      %v453 = vmin.f32 %v452, 1.0
      %v454 = vmax.f32 %v453, -1.0
      %v455 = vmul.f32 %v369, %v369
      %v456 = vmin.f32 16.0, %v455
      %v457 = vmul.f32 %v456, 2.1237322e-06
      %v458 = vadd.f32 %v457, 0.00028619796
      %v459 = vmul.f32 %v456, %v458
      %v460 = vadd.f32 %v459, 0.0036580483
      %v461 = vmul.f32 %v456, %v460
      %v462 = vadd.f32 %v461, 0.05243302
      %v463 = vmul.f32 %v456, %v462
      %v464 = vadd.f32 %v463, 0.18741608
      %v465 = vmul.f32 %v456, %v464
      %v466 = vadd.f32 %v465, 1.1283791
      %v467 = vmul.f32 %v369, %v466
      %v468 = vmul.f32 %v456, 3.8918573e-05
      %v469 = vadd.f32 %v468, 0.001143296
      %v470 = vmul.f32 %v456, %v469
      %v471 = vadd.f32 %v470, 0.014752088
      %v472 = vmul.f32 %v456, %v471
      %v473 = vadd.f32 %v472, 0.112945676
      %v474 = vmul.f32 %v456, %v473
      %v475 = vadd.f32 %v474, 0.4994258
      %v476 = vmul.f32 %v456, %v475
      %v477 = vadd.f32 %v476, 1.0
      %v478 = vrcp.pop %v477
      %v479 = vmul.f32 %v477, %v478
      %v480 = vsub.f32 1.0, %v479
      %v481 = vmul.f32 %v478, %v480
      %v482 = vadd.f32 %v478, %v481
      %vm483 = vweird.f32 %v477
      %vm484 = vweird.f32 %v478
      %vm485 = vmor %vm483, %vm484
      %v486 = vsel %vm485, %v478, %v482
      %v487 = vand.u32 2147483647, %v477
      %vm488 = vcmp.eq.f32.partialorder %v487, 8.507059e+37
      %v489 = vand.u32 %v477, 2147483648
      %v490 = vor.u32 1.1754944e-38, %v489
      %v491 = vsel %vm488, %v490, %v486
      %v492 = vmul.f32 %v467, %v491
      %v493 = vmin.f32 %v492, 1.0
      %v494 = vmax.f32 %v493, -1.0
      %v495 = vmul.f32 %v370, %v370
      %v496 = vmin.f32 16.0, %v495
      %v497 = vmul.f32 %v496, 2.1237322e-06
      %v498 = vadd.f32 %v497, 0.00028619796
      %v499 = vmul.f32 %v496, %v498
      %v500 = vadd.f32 %v499, 0.0036580483
      %v501 = vmul.f32 %v496, %v500
      %v502 = vadd.f32 %v501, 0.05243302
      %v503 = vmul.f32 %v496, %v502
      %v504 = vadd.f32 %v503, 0.18741608
      %v505 = vmul.f32 %v496, %v504
      %v506 = vadd.f32 %v505, 1.1283791
      %v507 = vmul.f32 %v370, %v506
      %v508 = vmul.f32 %v496, 3.8918573e-05
      %v509 = vadd.f32 %v508, 0.001143296
      %v510 = vmul.f32 %v496, %v509
      %v511 = vadd.f32 %v510, 0.014752088
      %v512 = vmul.f32 %v496, %v511
      %v513 = vadd.f32 %v512, 0.112945676
      %v514 = vmul.f32 %v496, %v513
      %v515 = vadd.f32 %v514, 0.4994258
      %v516 = vmul.f32 %v496, %v515
      %v517 = vadd.f32 %v516, 1.0
      %v518 = vrcp.pop %v517
      %v519 = vmul.f32 %v517, %v518
      %v520 = vsub.f32 1.0, %v519
      %v521 = vmul.f32 %v518, %v520
      %v522 = vadd.f32 %v518, %v521
      %vm523 = vweird.f32 %v517
      %vm524 = vweird.f32 %v518
      %vm525 = vmor %vm523, %vm524
      %v526 = vsel %vm525, %v518, %v522
      %v527 = vand.u32 2147483647, %v517
      %vm528 = vcmp.eq.f32.partialorder %v527, 8.507059e+37
      %v529 = vand.u32 %v517, 2147483648
      %v530 = vor.u32 1.1754944e-38, %v529
      %v531 = vsel %vm528, %v530, %v526
      %v532 = vmul.f32 %v507, %v531
      %v533 = vmin.f32 %v532, 1.0
      %v534 = vmax.f32 %v533, -1.0
      %v535 = vmul.f32 %v371, %v371
      %v536 = vmin.f32 16.0, %v535
      %v537 = vmul.f32 %v536, 2.1237322e-06
      %v538 = vadd.f32 %v537, 0.00028619796
      %v539 = vmul.f32 %v536, %v538
      %v540 = vadd.f32 %v539, 0.0036580483
      %v541 = vmul.f32 %v536, %v540
      %v542 = vadd.f32 %v541, 0.05243302
      %v543 = vmul.f32 %v536, %v542
      %v544 = vadd.f32 %v543, 0.18741608
      %v545 = vmul.f32 %v536, %v544
      %v546 = vadd.f32 %v545, 1.1283791
      %v547 = vmul.f32 %v371, %v546
      %v548 = vmul.f32 %v536, 3.8918573e-05
      %v549 = vadd.f32 %v548, 0.001143296
      %v550 = vmul.f32 %v536, %v549
      %v551 = vadd.f32 %v550, 0.014752088
      %v552 = vmul.f32 %v536, %v551
      %v553 = vadd.f32 %v552, 0.112945676
      %v554 = vmul.f32 %v536, %v553
      %v555 = vadd.f32 %v554, 0.4994258
      %v556 = vmul.f32 %v536, %v555
      %v557 = vadd.f32 %v556, 1.0
      %v558 = vrcp.pop %v557
      %v559 = vmul.f32 %v557, %v558
      %v560 = vsub.f32 1.0, %v559
      %v561 = vmul.f32 %v558, %v560
      %v562 = vadd.f32 %v558, %v561
      %vm563 = vweird.f32 %v557
      %vm564 = vweird.f32 %v558
      %vm565 = vmor %vm563, %vm564
      %v566 = vsel %vm565, %v558, %v562
      %v567 = vand.u32 2147483647, %v557
      %vm568 = vcmp.eq.f32.partialorder %v567, 8.507059e+37
      %v569 = vand.u32 %v557, 2147483648
      %v570 = vor.u32 1.1754944e-38, %v569
      %v571 = vsel %vm568, %v570, %v566
      %v572 = vmul.f32 %v547, %v571
      %v573 = vmin.f32 %v572, 1.0
      %v574 = vmax.f32 %v573, -1.0
      %v575 = vmul.f32 %v372, %v372
      %v576 = vmin.f32 16.0, %v575
      %v577 = vmul.f32 %v576, 2.1237322e-06
      %v578 = vadd.f32 %v577, 0.00028619796
      %v579 = vmul.f32 %v576, %v578
      %v580 = vadd.f32 %v579, 0.0036580483
      %v581 = vmul.f32 %v576, %v580
      %v582 = vadd.f32 %v581, 0.05243302
      %v583 = vmul.f32 %v576, %v582
      %v584 = vadd.f32 %v583, 0.18741608
      %v585 = vmul.f32 %v576, %v584
      %v586 = vadd.f32 %v585, 1.1283791
      %v587 = vmul.f32 %v372, %v586
      %v588 = vmul.f32 %v576, 3.8918573e-05
      %v589 = vadd.f32 %v588, 0.001143296
      %v590 = vmul.f32 %v576, %v589
      %v591 = vadd.f32 %v590, 0.014752088
      %v592 = vmul.f32 %v576, %v591
      %v593 = vadd.f32 %v592, 0.112945676
      %v594 = vmul.f32 %v576, %v593
      %v595 = vadd.f32 %v594, 0.4994258
      %v596 = vmul.f32 %v576, %v595
      %v597 = vadd.f32 %v596, 1.0
      %v598 = vrcp.pop %v597
      %v599 = vmul.f32 %v597, %v598
      %v600 = vsub.f32 1.0, %v599
      %v601 = vmul.f32 %v598, %v600
      %v602 = vadd.f32 %v598, %v601
      %vm603 = vweird.f32 %v597
      %vm604 = vweird.f32 %v598
      %vm605 = vmor %vm603, %vm604
      %v606 = vsel %vm605, %v598, %v602
      %v607 = vand.u32 2147483647, %v597
      %vm608 = vcmp.eq.f32.partialorder %v607, 8.507059e+37
      %v609 = vand.u32 %v597, 2147483648
      %v610 = vor.u32 1.1754944e-38, %v609
      %v611 = vsel %vm608, %v610, %v606
      %v612 = vmul.f32 %v587, %v611
      %v613 = vmin.f32 %v612, 1.0
      %v614 = vmax.f32 %v613, -1.0
      %v615 = vmul.f32 %v373, %v373
      %v616 = vmin.f32 16.0, %v615
      %v617 = vmul.f32 %v616, 2.1237322e-06
      %v618 = vadd.f32 %v617, 0.00028619796
      %v619 = vmul.f32 %v616, %v618
      %v620 = vadd.f32 %v619, 0.0036580483
      %v621 = vmul.f32 %v616, %v620
      %v622 = vadd.f32 %v621, 0.05243302
      %v623 = vmul.f32 %v616, %v622
      %v624 = vadd.f32 %v623, 0.18741608
      %v625 = vmul.f32 %v616, %v624
      %v626 = vadd.f32 %v625, 1.1283791
      %v627 = vmul.f32 %v373, %v626
      %v628 = vmul.f32 %v616, 3.8918573e-05
      %v629 = vadd.f32 %v628, 0.001143296
      %v630 = vmul.f32 %v616, %v629
      %v631 = vadd.f32 %v630, 0.014752088
      %v632 = vmul.f32 %v616, %v631
      %v633 = vadd.f32 %v632, 0.112945676
      %v634 = vmul.f32 %v616, %v633
      %v635 = vadd.f32 %v634, 0.4994258
      %v636 = vmul.f32 %v616, %v635
      %v637 = vadd.f32 %v636, 1.0
      %v638 = vrcp.pop %v637
      %v639 = vmul.f32 %v637, %v638
      %v640 = vsub.f32 1.0, %v639
      %v641 = vmul.f32 %v638, %v640
      %v642 = vadd.f32 %v638, %v641
      %vm643 = vweird.f32 %v637
      %vm644 = vweird.f32 %v638
      %vm645 = vmor %vm643, %vm644
      %v646 = vsel %vm645, %v638, %v642
      %v647 = vand.u32 2147483647, %v637
      %vm648 = vcmp.eq.f32.partialorder %v647, 8.507059e+37
      %v649 = vand.u32 %v637, 2147483648
      %v650 = vor.u32 1.1754944e-38, %v649
      %v651 = vsel %vm648, %v650, %v646
      %v652 = vmul.f32 %v627, %v651
      %v653 = vmin.f32 %v652, 1.0
      %v654 = vmax.f32 %v653, -1.0
      %v655 = vmul.f32 %v374, %v374
      %v656 = vmin.f32 16.0, %v655
      %v657 = vmul.f32 %v656, 2.1237322e-06
      %v658 = vadd.f32 %v657, 0.00028619796
      %v659 = vmul.f32 %v656, %v658
      %v660 = vadd.f32 %v659, 0.0036580483
      %v661 = vmul.f32 %v656, %v660
      %v662 = vadd.f32 %v661, 0.05243302
      %v663 = vmul.f32 %v656, %v662
      %v664 = vadd.f32 %v663, 0.18741608
      %v665 = vmul.f32 %v656, %v664
      %v666 = vadd.f32 %v665, 1.1283791
      %v667 = vmul.f32 %v374, %v666
      %v668 = vmul.f32 %v656, 3.8918573e-05
      %v669 = vadd.f32 %v668, 0.001143296
      %v670 = vmul.f32 %v656, %v669
      %v671 = vadd.f32 %v670, 0.014752088
      %v672 = vmul.f32 %v656, %v671
      %v673 = vadd.f32 %v672, 0.112945676
      %v674 = vmul.f32 %v656, %v673
      %v675 = vadd.f32 %v674, 0.4994258
      %v676 = vmul.f32 %v656, %v675
      %v677 = vadd.f32 %v676, 1.0
      %v678 = vrcp.pop %v677
      %v679 = vmul.f32 %v677, %v678
      %v680 = vsub.f32 1.0, %v679
      %v681 = vmul.f32 %v678, %v680
      %v682 = vadd.f32 %v678, %v681
      %vm683 = vweird.f32 %v677
      %vm684 = vweird.f32 %v678
      %vm685 = vmor %vm683, %vm684
      %v686 = vsel %vm685, %v678, %v682
      %v687 = vand.u32 2147483647, %v677
      %vm688 = vcmp.eq.f32.partialorder %v687, 8.507059e+37
      %v689 = vand.u32 %v677, 2147483648
      %v690 = vor.u32 1.1754944e-38, %v689
      %v691 = vsel %vm688, %v690, %v686
      %v692 = vmul.f32 %v667, %v691
      %v693 = vmin.f32 %v692, 1.0
      %v694 = vmax.f32 %v693, -1.0
      %v695 = vadd.f32 %v414, 1.0
      %v696 = vadd.f32 %v454, 1.0
      %v697 = vadd.f32 %v494, 1.0
      %v698 = vadd.f32 %v534, 1.0
      %v699 = vadd.f32 %v574, 1.0
      %v700 = vadd.f32 %v614, 1.0
      %v701 = vadd.f32 %v654, 1.0
      %v702 = vadd.f32 %v694, 1.0
      %v703 = vmul.f32 %v352, %v695
      %v704 = vmul.f32 %v353, %v696
      %v705 = vmul.f32 %v354, %v697
      %v706 = vmul.f32 %v355, %v698
      %v707 = vmul.f32 %v356, %v699
      %v708 = vmul.f32 %v357, %v700
      %v709 = vmul.f32 %v358, %v701
      %v710 = vmul.f32 %v359, %v702
      %v711 = vadd.f32 %v344, %v703
      %v712 = vadd.f32 %v345, %v704
      %v713 = vadd.f32 %v346, %v705
      %v714 = vadd.f32 %v347, %v706
      %v715 = vadd.f32 %v348, %v707
      %v716 = vadd.f32 %v349, %v708
      %v717 = vadd.f32 %v350, %v709
      %v718 = vadd.f32 %v351, %v710
      %vm719 = vcmask 64512
      %720 = vst.msk [vmem:[%s170] sm:$0xff] %vm719, %v711
      %721 = vst.msk [vmem:[%s170 + $0x8] sm:$0xff] %vm719, %v712
      %722 = vst.msk [vmem:[%s170 + $0x10] sm:$0xff] %vm719, %v713
      %723 = vst.msk [vmem:[%s170 + $0x18] sm:$0xff] %vm719, %v714
      %724 = vst.msk [vmem:[%s170 + $0x20] sm:$0xff] %vm719, %v715
      %725 = vst.msk [vmem:[%s170 + $0x28] sm:$0xff] %vm719, %v716
      %726 = vst.msk [vmem:[%s170 + $0x30] sm:$0xff] %vm719, %v717
      %727 = vst.msk [vmem:[%s170 + $0x38] sm:$0xff] %vm719, %v718
      %p728 = scmp.lt.s32.totalorder %s14, 1
      %s729 = scalar_select %p728, %s14, 1
      %s730 = smul.addr %s729, 8
      %s731 = smul.addr %s730, 8
      %s732 = scalar_lea.vmem %s3, %s731
      // Predicated region
      $region40: #{tpu_custom_call.1} parent=31 // pred_check
        %p733 = pneg %p100
      $region41: #{tpu_custom_call.1} parent=31 // pred_check_branch
        %735 = sbr.rel (%p733) target = $region43
      $region42: #{tpu_custom_call.1} parent=31 // pred_region
        _
      $region43: #{tpu_custom_call.1} parent=31 // pred_fallthru
        _
    $region32: #{tpu_custom_call.1} parent=5 // pred_fallthru
      _
    %p736 = scmp.le.s32.totalorder 2, %s9
    // Predicated region
    $region44: #{tpu_custom_call.1} parent=5 // pred_check
      %p737 = pneg %p736
    $region45: #{tpu_custom_call.1} parent=5 // pred_check_branch
      %739 = sbr.rel (%p737) target = $region47
    $region46: #{tpu_custom_call.1} parent=5 // pred_region
      %s740 = ssub.s32 %s9, 2
      // Predicated region
      $region48: #{tpu_custom_call.1} parent=46 // pred_check
        %p741 = pneg %p106
      $region49: #{tpu_custom_call.1} parent=46 // pred_check_branch
        %743 = sbr.rel (%p741) target = $region51
      $region50: #{tpu_custom_call.1} parent=46 // pred_region
        %p744 = scmp.lt.s32.totalorder %s15, 1
        %s745 = scalar_select %p744, %s15, 1
        %s746 = smul.addr %s745, 8
        %s747 = smul.addr %s746, 8
        %s748 = scalar_lea.vmem %s3, %s747
      $region51: #{tpu_custom_call.1} parent=46 // pred_fallthru
        _
    $region47: #{tpu_custom_call.1} parent=5 // pred_fallthru
      _
  $region6: #{tpu_custom_call.1} parent=0 // loop_footer
    %s13 = sadd.s32 1, %s9
  $region7: #{tpu_custom_call.1} parent=0 // loop_footer_branch
    %8 = sbr.rel target = $region3
  $region8: #{tpu_custom_call.1} parent=0 // loop_exit
    _

</llo_original>
